<compile_context>
chip_gen: v7x
topology: tpu7x:2x2x1
jax: 0.10.0
libtpu: 0.0.40
codegen_flags: <defaults>
</compile_context>

<pallas_src>
from math import ceil

import jax
import jax.numpy as jnp
from jax.experimental import pallas as pl
from jax.experimental.pallas import tpu as pltpu

_LANE = 128
_HASH_PRIMES = (1, 2654435761, 805459861)


# --------------------------------------------------------------------------
# posenc window (same semantics as the torch helper)
# --------------------------------------------------------------------------
def posenc_window(windows_param, min_bands, max_bands, dim_encoding):
    bands = jnp.linspace(min_bands, max_bands, dim_encoding)
    x = jnp.clip(windows_param - bands, 0.0, 1.0)
    return 0.5 * (1.0 - jnp.cos(jnp.pi * x))


# --------------------------------------------------------------------------
# Multi-resolution hash-grid encoding (plain-JAX stand-in for tcnn.Encoding).
# Emits per-level features with the batch on the LAST (lane) axis so the
# blended-embedding tensor is born in the layout the Pallas kernel wants.
# --------------------------------------------------------------------------
def hash_grid_encode_t(points, tables_c, resolutions, hashmap_size):
    """points: (B, 3) in [0,1]; tables_c: (L, T, Fpl) -> list of L (Fpl, B) f32."""
    primes = jnp.array(_HASH_PRIMES, dtype=jnp.uint32)
    L, _, Fpl = tables_c.shape
    B = points.shape[0]
    feats = []
    for lvl in range(L):
        res = resolutions[lvl]
        scaled = points * (res - 1)
        p0f = jnp.floor(scaled)
        frac = scaled - p0f
        p0 = p0f.astype(jnp.int32)
        table_t = tables_c[lvl].T                          # (Fpl, T), small
        feat = jnp.zeros((Fpl, B), jnp.float32)
        for corner in range(8):
            offs = jnp.array([(corner >> d) & 1 for d in range(3)], dtype=jnp.int32)
            idx = p0 + offs[None, :]
            w = jnp.prod(
                jnp.where(offs[None, :] == 1, frac, 1.0 - frac), axis=-1
            )                                              # (B,)
            h = idx.astype(jnp.uint32) * primes[None, :]
            h = (h[:, 0] ^ h[:, 1] ^ h[:, 2]) % jnp.uint32(hashmap_size)
            gathered = jnp.take(table_t, h.astype(jnp.int32), axis=1)   # (Fpl, B)
            feat = feat + w[None, :] * gathered
        feats.append(feat)
    return feats


# --------------------------------------------------------------------------
# Pallas kernel: conditioning-code blend with batch on lanes
#   out[d, b] = sum_h emb[h, d, b] * cond'[h, b]
#   (cond' carries the hash-encoding window; the level window is already folded
#    into emb as a per-level scalar in the wrapper)
# --------------------------------------------------------------------------
def _blend_kernel(emb_ref, cond_ref, out_ref):
    n_hash = emb_ref.shape[0]                            # static (e.g. 4)
    cond = cond_ref[...].astype(jnp.float32)             # (H, TB)

    # Unrolled lane-wise FMA chain over H: VPU only, f32 accumulation,
    # no XLU cross-lane reduction, unmasked lane-dense store.
    acc = emb_ref[0].astype(jnp.float32) * cond[0:1, :]  # (D, TB)
    for h in range(1, n_hash):
        acc = acc + emb_ref[h].astype(jnp.float32) * cond[h:h + 1, :]

    out_ref[...] = acc.astype(out_ref.dtype)


def _choose_batch_tiling(batch, batch_tile=8192):
    """Pick (tile, padded_batch): lane-aligned, minimal padding, >=2 tiles when
    possible so both v7x TensorCores get work on the parallel grid axis."""
    b_aligned = -(-batch // _LANE) * _LANE
    tb = max(_LANE, min((int(batch_tile) // _LANE) * _LANE, b_aligned))
    n_tiles = -(-b_aligned // tb)
    if n_tiles == 1 and b_aligned >= 2 * _LANE:
        n_tiles = 2
    per_tile = -(-b_aligned // n_tiles)
    tb = -(-per_tile // _LANE) * _LANE
    return tb, n_tiles * tb


def blend_pallas(emb_hdb, cond_hb, tb, out_dtype=jnp.float32):
    """emb_hdb: (H, D, Bp), cond_hb: (H, Bp) f32 -> (D, Bp) out_dtype."""
    H, D, Bp = emb_hdb.shape
    assert Bp % tb == 0 and tb % _LANE == 0
    grid_b = Bp // tb

    return pl.pallas_call(
        _blend_kernel,
        out_shape=jax.ShapeDtypeStruct((D, Bp), out_dtype),
        grid_spec=pl.GridSpec(
            grid=(grid_b,),
            in_specs=[
                pl.BlockSpec((H, D, tb), lambda i: (0, 0, i)),   # emb (compute dtype)
                pl.BlockSpec((H, tb), lambda i: (0, i)),         # cond' (f32, tiny)
            ],
            out_specs=pl.BlockSpec((D, tb), lambda i: (0, i)),   # lane-dense store
        ),
        compiler_params=pltpu.CompilerParams(
            dimension_semantics=("parallel",),
        ),
    )(emb_hdb, cond_hb)


# --------------------------------------------------------------------------
# HashEnsemble forward
# --------------------------------------------------------------------------
def hash_ensemble_forward(
    in_tensor,
    conditioning_code,
    tables,                 # (C, L, T, Fpl)  hash-table params
    resolutions,            # python list of per-level grid resolutions
    config,                 # dict with the HashEnsemble / TCNN config
    windows_param=None,
    window_hash_encodings=None,
    compute_dtype=jnp.bfloat16,
    out_dtype=jnp.float32,
    batch_tile=8192,
):
    B = in_tensor.shape[0]
    L = config["n_levels"]
    F = config["n_features_per_level"]
    nH = config["n_hash_encodings"]
    n_total = nH * F
    P = (8 // F) if n_total >= 8 else nH
    C, _, T, Fpl = tables.shape
    H, D = C * P, L * F
    assert H == nH and Fpl == P * F
    assert conditioning_code.shape[-1] == nH

    # ---- batch tiling chosen up front; pad the tiny points tensor, not emb ----
    tb, b_pad = _choose_batch_tiling(B, batch_tile)
    pts = in_tensor
    if b_pad != B:
        pts = jnp.pad(pts, ((0, b_pad - B), (0, 0)))

    # ---- windows ---------------------------------------------------------------
    cc = conditioning_code.astype(jnp.float32)
    whash = None
    if window_hash_encodings is not None:
        if window_hash_encodings == 1 and config["disable_initial_hash_ensemble"]:
            cc = jnp.ones_like(cc)
        elif config["use_soft_transition"] and window_hash_encodings < 2:
            alpha = window_hash_encodings - 1
            cc = alpha * cc
            cc = cc.at[:, 0].add((1 - alpha) * 1.0)
        whash = posenc_window(window_hash_encodings, 0.0, nH - 1, nH)
    wl = None
    if windows_param is not None:
        wl = posenc_window(windows_param, 0.0, L - 1, L)   # one scalar per level

    # ---- hash-grid encode, emitted directly in (H, D, B) batch-on-lanes layout --
    # einops 'b c (l p f) -> (c p) (l f) b' is realized piecewise at gather time:
    # no full-tensor transpose/cast pass over the embedding tensor.
    parts = []
    for c in range(C):
        level_feats = hash_grid_encode_t(pts, tables[c], resolutions, T)
        per_level = []
        for lvl in range(L):
            f = level_feats[lvl]                           # (Fpl, Bp) f32
            if wl is not None:
                f = f * wl[lvl]                            # fold level window (scalar)
            per_level.append(f.reshape(P, F, b_pad).astype(compute_dtype))
        parts.append(jnp.stack(per_level, axis=1).reshape(P, D, b_pad))
    emb_hdb = parts[0] if C == 1 else jnp.concatenate(parts, axis=0)   # (H, D, Bp)

    # Fold the hash-encoding window into the conditioning code (tiny (B, H) op).
    if whash is not None:
        cc = cc * whash[None, :]
    cond_hb = cc.T                                         # (H, B) f32
    if b_pad != B:
        cond_hb = jnp.pad(cond_hb, ((0, 0), (0, b_pad - B)))

    out_db = blend_pallas(emb_hdb, cond_hb, tb, out_dtype=out_dtype)   # (D, Bp)
    return out_db[:, :B].T                                             # (B, D)


# --------------------------------------------------------------------------
# Pure-JAX, torch-semantics reference (unfolded windows, original rearrange)
# --------------------------------------------------------------------------
def reference_forward(in_tensor, conditioning_code, tables, resolutions, config,
                      windows_param=None, window_hash_encodings=None):
    B = in_tensor.shape[0]
    L = config["n_levels"]
    F = config["n_features_per_level"]
    nH = config["n_hash_encodings"]
    n_total = nH * F
    P = (8 // F) if n_total >= 8 else nH
    C, _, T, _ = tables.shape

    embs = []
    for c in range(C):
        feats = hash_grid_encode_t(in_tensor, tables[c], resolutions, T)
        embs.append(jnp.concatenate([f.T for f in feats], axis=-1))    # (B, L*Fpl)
    embeddings = jnp.stack(embs, axis=1)                               # (B, C, L*Fpl)

    e = embeddings.reshape(B, C, L, P, F)
    e = jnp.transpose(e, (0, 2, 4, 1, 3)).reshape(B, L * F, C * P)     # (B, D, H)

    cc = conditioning_code.astype(jnp.float32)
    if window_hash_encodings is not None:
        if window_hash_encodings == 1 and config["disable_initial_hash_ensemble"]:
            cc = jnp.ones_like(cc)
        elif config["use_soft_transition"] and window_hash_encodings < 2:
            alpha = window_hash_encodings - 1
            cc = alpha * cc
            cc = cc.at[:, 0].add((1 - alpha) * 1.0)
        wh = posenc_window(window_hash_encodings, 0.0, nH - 1, nH)
        e = e * wh[None, None, :]
    if windows_param is not None:
        wl = posenc_window(windows_param, 0.0, L - 1, L)
        wl = jnp.repeat(wl, F)
        e = e * wl[None, :, None]
    return jnp.einsum("bdh,bh->bd", e, cc)


# --------------------------------------------------------------------------
if __name__ == "__main__":
    # Small HashEnsemble config (consistent with the module's constraints:
    # n_total_features = 4 * 2 = 8 -> one underlying hash encoding, 8 feats/level)
    config = dict(
        n_hash_encodings=4,
        n_levels=8,
        n_features_per_level=2,
        log2_hashmap_size=10,
        base_resolution=4,
        per_level_scale=1.5,
        disable_initial_hash_ensemble=False,
        use_soft_transition=False,
    )
    n_total_features = config["n_hash_encodings"] * config["n_features_per_level"]
    Fpl = 8 if n_total_features >= 8 else n_total_features
    C = ceil(n_total_features / 8)
    L = config["n_levels"]
    T = 2 ** config["log2_hashmap_size"]
    D = L * config["n_features_per_level"]
    resolutions = [
        int(ceil(config["base_resolution"] * config["per_level_scale"] ** l)) + 1
        for l in range(L)
    ]

    # B deliberately NOT a multiple of 128 to exercise source-side point padding.
    B = 1000
    key = jax.random.PRNGKey(0)
    k_tab, k_pts, k_cond = jax.random.split(key, 3)

    tables = jax.random.uniform(
        k_tab, (C, L, T, Fpl), minval=-0.1, maxval=0.1, dtype=jnp.float32
    )
    in_tensor = jax.random.uniform(k_pts, (B, 3), dtype=jnp.float32)
    conditioning_code = jax.random.normal(
        k_cond, (B, config["n_hash_encodings"]), dtype=jnp.float32
    )

    kwargs = dict(
        windows_param=5.0,
        window_hash_encodings=2.5,
    )

    ref = reference_forward(in_tensor, conditioning_code, tables, resolutions,
                            config, **kwargs)
    ref = jax.block_until_ready(ref)

    # f32 compute path: validates kernel + window folding + layout against the
    # torch-semantics f32 reference with a tight tolerance.
    out_f32 = hash_ensemble_forward(
        in_tensor, conditioning_code, tables, resolutions, config,
        compute_dtype=jnp.float32, out_dtype=jnp.float32, **kwargs)
    out_f32 = jax.block_until_ready(out_f32)
    assert out_f32.shape == (B, D)
    assert jnp.allclose(out_f32, ref, rtol=1e-4, atol=1e-5), "f32 mismatch vs reference"

    # bf16 fast path (halves HBM traffic for the dominant read): loose tolerance.
    out_bf16 = hash_ensemble_forward(
        in_tensor, conditioning_code, tables, resolutions, config,
        compute_dtype=jnp.bfloat16, out_dtype=jnp.float32, **kwargs)
    out_bf16 = jax.block_until_ready(out_bf16)
    assert out_bf16.shape == (B, D)
    assert jnp.allclose(out_bf16, ref, rtol=5e-2, atol=5e-3), "bf16 mismatch vs reference"

    print("KERNEL_OK")
</pallas_src>

<mosaic_0001>
module attributes {stable_mosaic.version = 11 : i64} {
  func.func @_blend_kernel(%arg0: i32, %arg1: memref<4x16x512xf32, #tpu.memory_space<vmem>>, %arg2: memref<4x512xf32, #tpu.memory_space<vmem>>, %arg3: memref<16x512xf32, #tpu.memory_space<vmem>>) attributes {dimension_semantics = [#tpu.dimension_semantics<parallel>], iteration_bounds = array<i64: 2>, scalar_prefetch = 0 : i64, scratch_operands = 0 : i64, tpu.core_type = #tpu.core_type<tc>, window_params = [{transform_indices = @transform_0, window_bounds = array<i64: 4, 16, 512>}, {transform_indices = @transform_1, window_bounds = array<i64: 4, 512>}, {transform_indices = @transform_2, window_bounds = array<i64: 16, 512>}]} {
    %c0 = arith.constant 0 : index
    %c0_0 = arith.constant 0 : index
    %0 = vector.load %arg2[%c0, %c0_0] : memref<4x512xf32, #tpu.memory_space<vmem>>, vector<4x512xf32>
    %c0_1 = arith.constant 0 : index
    %c0_2 = arith.constant 0 : index
    %c0_3 = arith.constant 0 : index
    %1 = vector.load %arg1[%c0_1, %c0_2, %c0_3] : memref<4x16x512xf32, #tpu.memory_space<vmem>>, vector<1x16x512xf32>
    %2 = vector.shape_cast %1 : vector<1x16x512xf32> to vector<16x512xf32>
    %3 = vector.extract_strided_slice %0 {offsets = [0, 0], sizes = [1, 512], strides = [1, 1]} : vector<4x512xf32> to vector<1x512xf32>
    %4 = vector.broadcast %3 : vector<1x512xf32> to vector<16x512xf32>
    %5 = arith.mulf %2, %4 : vector<16x512xf32>
    %c1 = arith.constant 1 : index
    %c0_4 = arith.constant 0 : index
    %c0_5 = arith.constant 0 : index
    %6 = vector.load %arg1[%c1, %c0_4, %c0_5] : memref<4x16x512xf32, #tpu.memory_space<vmem>>, vector<1x16x512xf32>
    %7 = vector.shape_cast %6 : vector<1x16x512xf32> to vector<16x512xf32>
    %8 = vector.extract_strided_slice %0 {offsets = [1, 0], sizes = [1, 512], strides = [1, 1]} : vector<4x512xf32> to vector<1x512xf32>
    %9 = vector.broadcast %8 : vector<1x512xf32> to vector<16x512xf32>
    %10 = arith.mulf %7, %9 : vector<16x512xf32>
    %11 = arith.addf %5, %10 : vector<16x512xf32>
    %c2 = arith.constant 2 : index
    %c0_6 = arith.constant 0 : index
    %c0_7 = arith.constant 0 : index
    %12 = vector.load %arg1[%c2, %c0_6, %c0_7] : memref<4x16x512xf32, #tpu.memory_space<vmem>>, vector<1x16x512xf32>
    %13 = vector.shape_cast %12 : vector<1x16x512xf32> to vector<16x512xf32>
    %14 = vector.extract_strided_slice %0 {offsets = [2, 0], sizes = [1, 512], strides = [1, 1]} : vector<4x512xf32> to vector<1x512xf32>
    %15 = vector.broadcast %14 : vector<1x512xf32> to vector<16x512xf32>
    %16 = arith.mulf %13, %15 : vector<16x512xf32>
    %17 = arith.addf %11, %16 : vector<16x512xf32>
    %c3 = arith.constant 3 : index
    %c0_8 = arith.constant 0 : index
    %c0_9 = arith.constant 0 : index
    %18 = vector.load %arg1[%c3, %c0_8, %c0_9] : memref<4x16x512xf32, #tpu.memory_space<vmem>>, vector<1x16x512xf32>
    %19 = vector.shape_cast %18 : vector<1x16x512xf32> to vector<16x512xf32>
    %20 = vector.extract_strided_slice %0 {offsets = [3, 0], sizes = [1, 512], strides = [1, 1]} : vector<4x512xf32> to vector<1x512xf32>
    %21 = vector.broadcast %20 : vector<1x512xf32> to vector<16x512xf32>
    %22 = arith.mulf %19, %21 : vector<16x512xf32>
    %23 = arith.addf %17, %22 : vector<16x512xf32>
    %c0_10 = arith.constant 0 : index
    %c0_11 = arith.constant 0 : index
    %24 = vector.load %arg3[%c0_10, %c0_11] : memref<16x512xf32, #tpu.memory_space<vmem>>, vector<16x512xf32>
    tpu.vector_store %arg3[%c0_10, %c0_11], %23 {strides = array<i32>} : memref<16x512xf32, #tpu.memory_space<vmem>>, vector<16x512xf32>,
    return
  }
  func.func @transform_0(%arg0: i32) -> (i32, i32, i32) {
    %c0_i32 = arith.constant 0 : i32
    %c0_i32_0 = arith.constant 0 : i32
    %c0_i32_1 = arith.constant 0 : i32
    return %c0_i32, %c0_i32_0, %arg0 : i32, i32, i32
  }
  func.func @transform_1(%arg0: i32) -> (i32, i32) {
    %c0_i32 = arith.constant 0 : i32
    %c0_i32_0 = arith.constant 0 : i32
    return %c0_i32, %arg0 : i32, i32
  }
  func.func @transform_2(%arg0: i32) -> (i32, i32) {
    %c0_i32 = arith.constant 0 : i32
    %c0_i32_0 = arith.constant 0 : i32
    return %c0_i32, %arg0 : i32, i32
  }
}

</mosaic_0001>

<llo_original>
// kernel: tpu_custom_call.1
$region0: #{tpu_custom_call.1}
  #allocation0 [shape = 'u32[]', space=smem, size = 0x4, offset = 0x4, fixed_abs, tag = 'smem constant byte address 0x4 - core index']
  #allocation1 [shape = 'u32[144,128]{1,0:T(1,128)}', space=vmem, size = 0x12000, scoped, tag = 'internal scratch']
  %s0 = inlined_call_operand.hbm [shape: f32[4,16,1024], index: 0, kind: input, shape index: {}]
  %s1 = inlined_call_operand.hbm [shape: f32[4,1024], index: 1, kind: input, shape index: {}]
  %s2 = inlined_call_operand.hbm [shape: f32[16,1024], index: 2, kind: output, shape index: {}]
  %s3 = sld [smem:[#allocation0]]
  $region49: #{tpu_custom_call.1} parent=0
    _
  %s5 = ssub.s32 1, %s3
  %s6 = scalar_select 0, %s5, %s3
  $region1: #{tpu_custom_call.1} parent=0
    #allocation2 [shape = 'u8[262144]{0}', space=vmem, size = 0x40000, scoped, tag = 'input window, operand 0']
    #allocation3 [shape = 's32[2]{0}', space=sflag, size = 0x8, scoped, tag = 'scoped memory for tpu_custom_call.1']
    #allocation4 [shape = 's32[2]{0}', space=sflag, size = 0x8, scoped, tag = 'scoped memory for tpu_custom_call.1']
    #allocation5 [shape = 'u8[16384]{0}', space=vmem, size = 0x4000, scoped, tag = 'input window, operand 1']
    #allocation6 [shape = 's32[2]{0}', space=sflag, size = 0x8, scoped, tag = 'scoped memory for tpu_custom_call.1']
    #allocation7 [shape = 'u8[65536]{0}', space=vmem, size = 0x10000, scoped, tag = 'output window, operand 0']
    %7 = vsyncpa [#allocation3], 0
    %s8 = scalar_lea.sflag [#allocation3], 1
    %9 = vsyncpa %s8, 0
    %10 = vsyncpa [#allocation6], 0
    %s11 = scalar_lea.sflag [#allocation6], 1
    %12 = vsyncpa %s11, 0
    %13 = vsyncpa [#allocation4], 0
    %s14 = scalar_lea.sflag [#allocation4], 1
    %15 = vsyncpa %s14, 0
    loop: start=0, step=1, limit=4
    $region2: #{tpu_custom_call.1} parent=1 // loop_pre_header
      _
    $region3: #{tpu_custom_call.1} parent=1 // loop_header
      %s17 = sphi 0, %s21
      %p18 = scmp.ge.s32.totalorder %s17, 4
      %s27 = sphi 0, %s29
      %s30 = sphi 0, %s27
      %s31 = sphi 0, %s30
      %s47 = sphi 0, %s31
      %s53 = sphi 0, %s55
      %s56 = sphi 0, %s53
      %s57 = sphi 0, %s56
      %s73 = sphi 0, %s57
      %s79 = sphi 0, %s81
      %s82 = sphi 0, %s79
      %s83 = sphi 0, %s82
      %s99 = sphi 0, %s83
    $region4: #{tpu_custom_call.1} parent=1 // loop_header_branch
      %20 = sbr.rel (%p18) target = $region8
    $region5: #{tpu_custom_call.1} parent=1 // loop_body
      %s22 = ssub.s32 %s17, 1
      %s23 = ssub.s32 %s17, 2
      %s24 = sadd.s32 %s17, 1
      %s25 = ssub.s32 %s17, %s24
      %p26 = scmp.eq.s32.totalorder %s25, 0
      %s28 = sadd.s32 %s27, 1
      %s29 = scalar_select %p26, %s27, %s28
      %p32 = pneg %p26
      %p33 = scmp.eq.s32.totalorder %s17, 1
      %p34 = por %p32, %p33
      %p35 = scmp.ne.s32.totalorder %s27, %s30
      %p36 = scmp.eq.s32.totalorder %s17, 0
      %p37 = por %p35, %p36
      %p38 = scmp.ne.s32.totalorder %s27, %s30
      %p39 = scmp.eq.s32.totalorder %s22, 1
      %p40 = por %p38, %p39
      %p41 = scmp.ne.s32.totalorder %s30, %s31
      %p42 = scmp.eq.s32.totalorder %s22, 0
      %p43 = por %p41, %p42
      %p44 = scmp.ne.s32.totalorder %s30, %s31
      %p45 = scmp.eq.s32.totalorder %s23, 1
      %p46 = por %p44, %p45
      %p48 = scmp.ne.s32.totalorder %s31, %s47
      %p49 = scmp.eq.s32.totalorder %s23, 0
      %p50 = por %p48, %p49
      %s51 = ssub.s32 %s17, %s24
      %p52 = scmp.eq.s32.totalorder %s51, 0
      %s54 = sadd.s32 %s53, 1
      %s55 = scalar_select %p52, %s53, %s54
      %p58 = pneg %p52
      %p59 = scmp.eq.s32.totalorder %s17, 1
      %p60 = por %p58, %p59
      %p61 = scmp.ne.s32.totalorder %s53, %s56
      %p62 = scmp.eq.s32.totalorder %s17, 0
      %p63 = por %p61, %p62
      %p64 = scmp.ne.s32.totalorder %s53, %s56
      %p65 = scmp.eq.s32.totalorder %s22, 1
      %p66 = por %p64, %p65
      %p67 = scmp.ne.s32.totalorder %s56, %s57
      %p68 = scmp.eq.s32.totalorder %s22, 0
      %p69 = por %p67, %p68
      %p70 = scmp.ne.s32.totalorder %s56, %s57
      %p71 = scmp.eq.s32.totalorder %s23, 1
      %p72 = por %p70, %p71
      %p74 = scmp.ne.s32.totalorder %s57, %s73
      %p75 = scmp.eq.s32.totalorder %s23, 0
      %p76 = por %p74, %p75
      %s77 = ssub.s32 %s17, %s24
      %p78 = scmp.eq.s32.totalorder %s77, 0
      %s80 = sadd.s32 %s79, 1
      %s81 = scalar_select %p78, %s79, %s80
      %p84 = pneg %p78
      %p85 = scmp.eq.s32.totalorder %s17, 1
      %p86 = por %p84, %p85
      %p87 = scmp.ne.s32.totalorder %s79, %s82
      %p88 = scmp.eq.s32.totalorder %s17, 0
      %p89 = por %p87, %p88
      %p90 = scmp.ne.s32.totalorder %s79, %s82
      %p91 = scmp.eq.s32.totalorder %s22, 1
      %p92 = por %p90, %p91
      %p93 = scmp.ne.s32.totalorder %s82, %s83
      %p94 = scmp.eq.s32.totalorder %s22, 0
      %p95 = por %p93, %p94
      %p96 = scmp.ne.s32.totalorder %s82, %s83
      %p97 = scmp.eq.s32.totalorder %s23, 1
      %p98 = por %p96, %p97
      %p100 = scmp.ne.s32.totalorder %s83, %s99
      %p101 = scmp.eq.s32.totalorder %s23, 0
      %p102 = por %p100, %p101
      %p103 = scmp.le.s32.totalorder 1, %s17
      %p104 = scmp.lt.s32.totalorder %s17, 3
      %p105 = pnand %p103, %p104
      %p106 = pneg %p105
      // Predicated region
      $region9: #{tpu_custom_call.1} parent=5 // pred_check
        _
      $region10: #{tpu_custom_call.1} parent=5 // pred_check_branch
        %108 = sbr.rel (%p105) target = $region12
      $region11: #{tpu_custom_call.1} parent=5 // pred_region
        %s109 = ssub.s32 %s17, 1
      $region12: #{tpu_custom_call.1} parent=5 // pred_fallthru
        _
      %p110 = scmp.lt.s32.totalorder %s17, 2
      // Predicated region
      $region13: #{tpu_custom_call.1} parent=5 // pred_check
        %p111 = pneg %p110
      $region14: #{tpu_custom_call.1} parent=5 // pred_check_branch
        %113 = sbr.rel (%p111) target = $region16
      $region15: #{tpu_custom_call.1} parent=5 // pred_region
        // Predicated region
        $region17: #{tpu_custom_call.1} parent=15 // pred_check
          %p114 = pneg %p37
        $region18: #{tpu_custom_call.1} parent=15 // pred_check_branch
          %116 = sbr.rel (%p114) target = $region20
        $region19: #{tpu_custom_call.1} parent=15 // pred_region
          %s117 = sand.u32 %s27, 1
          %s118 = scalar_lea.sflag [#allocation3], %s117
          %s119 = sand.u32 %s27, 1
          %s120 = smul.addr %s119, 256
          %s121 = scalar_lea.vmem [#allocation2], %s120
          %s122 = smul.u32 4, %s17
          %s124 = ssub.s32 4096, 4096
          %125 = vsyncadd %s118, %s124
          %s126 = smul.addr %s122, 128
          %s127 = scalar_lea.hbm %s0, %s126
          %s128 = sshll.u32 %s121, 4
          %s129 = int_to_ptr.vmem [resolvable:$true] %s128
          %134 = dma.hbm_to_vmem [thread:$0]  %s127, 4096, %s129, %s118, 1024, 512, 32
        $region20: #{tpu_custom_call.1} parent=15 // pred_fallthru
          _
        // Predicated region
        $region21: #{tpu_custom_call.1} parent=15 // pred_check
          %p135 = pneg %p63
        $region22: #{tpu_custom_call.1} parent=15 // pred_check_branch
          %137 = sbr.rel (%p135) target = $region24
        $region23: #{tpu_custom_call.1} parent=15 // pred_region
          %s138 = sand.u32 %s53, 1
          %s139 = scalar_lea.sflag [#allocation6], %s138
          %s140 = sand.u32 %s53, 1
          %s141 = smul.addr %s140, 16
          %s142 = scalar_lea.vmem [#allocation5], %s141
          %s143 = smul.u32 4, %s17
          %s145 = ssub.s32 256, 256
          %146 = vsyncadd %s139, %s145
          %s147 = smul.addr %s143, 64
          %s148 = scalar_lea.hbm %s1, %s147
          %s150 = sshll.u32 %s142, 4
          %s151 = int_to_ptr.vmem [resolvable:$true] %s150
          %153 = dma.hbm_to_vmem [thread:$0]  %s148, 256, %s151, %s139
        $region24: #{tpu_custom_call.1} parent=15 // pred_fallthru
          _
      $region16: #{tpu_custom_call.1} parent=5 // pred_fallthru
        _
      %p154 = scmp.le.s32.totalorder 1, %s17
      %p155 = scmp.lt.s32.totalorder %s17, 3
      %p156 = pnand %p154, %p155
      %p157 = pneg %p156
      // Predicated region
      $region25: #{tpu_custom_call.1} parent=5 // pred_check
        _
      $region26: #{tpu_custom_call.1} parent=5 // pred_check_branch
        %159 = sbr.rel (%p156) target = $region28
      $region27: #{tpu_custom_call.1} parent=5 // pred_region
        %s160 = ssub.s32 %s17, 1
        %s161 = sand.u32 %s30, 1
        %s162 = scalar_lea.sflag [#allocation3], %s161
        %s163 = sand.u32 %s30, 1
        %s164 = smul.addr %s163, 256
        %s165 = scalar_lea.vmem [#allocation2], %s164
        // Predicated region
        $region29: #{tpu_custom_call.1} parent=27 // pred_check
          %p166 = pneg %p43
        $region30: #{tpu_custom_call.1} parent=27 // pred_check_branch
          %168 = sbr.rel (%p166) target = $region32
        $region31: #{tpu_custom_call.1} parent=27 // pred_region
          %169 = dma.done %s162, 4096
        $region32: #{tpu_custom_call.1} parent=27 // pred_fallthru
          _
        %s170 = sand.u32 %s56, 1
        %s171 = scalar_lea.sflag [#allocation6], %s170
        %s172 = sand.u32 %s56, 1
        %s173 = smul.addr %s172, 16
        %s174 = scalar_lea.vmem [#allocation5], %s173
        // Predicated region
        $region33: #{tpu_custom_call.1} parent=27 // pred_check
          %p175 = pneg %p69
        $region34: #{tpu_custom_call.1} parent=27 // pred_check_branch
          %177 = sbr.rel (%p175) target = $region36
        $region35: #{tpu_custom_call.1} parent=27 // pred_region
          %178 = dma.done %s171, 256
        $region36: #{tpu_custom_call.1} parent=27 // pred_fallthru
          _
        %s179 = sand.u32 %s30, 1
        %s180 = scalar_lea.sflag [#allocation3], %s179
        %s181 = sand.u32 %s30, 1
        %s182 = smul.addr %s181, 256
        %s183 = scalar_lea.vmem [#allocation2], %s182
        %p184 = pneg %p43
        %p185 = pneg %p40
        %s186 = sand.u32 %s56, 1
        %s187 = scalar_lea.sflag [#allocation6], %s186
        %s188 = sand.u32 %s56, 1
        %s189 = smul.addr %s188, 16
        %s190 = scalar_lea.vmem [#allocation5], %s189
        %p191 = pneg %p69
        %p192 = pneg %p66
        %p193 = pneg %p95
        %p194 = pneg %p92
        %s195 = sand.u32 %s82, 1
        %s196 = scalar_lea.sflag [#allocation4], %s195
        %s197 = sand.u32 %s82, 1
        %s198 = smul.addr %s197, 64
        %s199 = scalar_lea.vmem [#allocation7], %s198
        %s200 = smul.u32 4, %s22
        %s201 = smul.u32 4, %s22
        %s202 = smul.u32 4, %s22
        %v203 = vld [vmem:[%s174] sm:$0xff]
        %v204 = vld [vmem:[%s174 + $0x8] sm:$0xff]
        %v205 = vld [vmem:[%s165] sm:$0xff]
        %v206 = vld [vmem:[%s165 + $0x8] sm:$0xff]
        %v207 = vld [vmem:[%s165 + $0x10] sm:$0xff]
        %v208 = vld [vmem:[%s165 + $0x18] sm:$0xff]
        %v209 = vld [vmem:[%s165 + $0x20] sm:$0xff]
        %v210 = vld [vmem:[%s165 + $0x28] sm:$0xff]
        %v211 = vld [vmem:[%s165 + $0x30] sm:$0xff]
        %v212 = vld [vmem:[%s165 + $0x38] sm:$0xff]
        %v215 = vlaneseq
        %v216 = vshrl.u32 %v215, 7
        %v217 = vsub.s32 0, %v216
        %v218 = vrot.slane %v203, %v217
        %v219 = vlaneseq
        %v220 = vshrl.u32 %v219, 7
        %v221 = vsub.s32 4, %v220
        %v222 = vrot.slane %v203, %v221
        %v223 = vlaneseq
        %v224 = vshrl.u32 %v223, 7
        %v225 = vsub.s32 0, %v224
        %v226 = vrot.slane %v204, %v225
        %v227 = vlaneseq
        %v228 = vshrl.u32 %v227, 7
        %v229 = vsub.s32 4, %v228
        %v230 = vrot.slane %v204, %v229
        %v235 = vlaneseq
        %v236 = vshrl.u32 %v235, 7
        %v237 = vsub.s32 0, %v236
        %v238 = vrot.slane %v218, %v237
        %v239 = vlaneseq
        %v240 = vshrl.u32 %v239, 7
        %v241 = vsub.s32 0, %v240
        %v242 = vrot.slane %v222, %v241
        %v243 = vlaneseq
        %v244 = vshrl.u32 %v243, 7
        %v245 = vsub.s32 0, %v244
        %v246 = vrot.slane %v226, %v245
        %v247 = vlaneseq
        %v248 = vshrl.u32 %v247, 7
        %v249 = vsub.s32 0, %v248
        %v250 = vrot.slane %v230, %v249
        %v251 = vmul.f32 %v205, %v238
        %v252 = vmul.f32 %v206, %v242
        %v253 = vmul.f32 %v207, %v246
        %v254 = vmul.f32 %v208, %v250
        %v255 = vmul.f32 %v209, %v238
        %v256 = vmul.f32 %v210, %v242
        %v257 = vmul.f32 %v211, %v246
        %v258 = vmul.f32 %v212, %v250
        %s259 = scalar_lea.vmem %s165, 64 [#allocation2]
        %v260 = vld [vmem:[%s259] sm:$0xff]
        %v261 = vld [vmem:[%s259 + $0x8] sm:$0xff]
        %v262 = vld [vmem:[%s259 + $0x10] sm:$0xff]
        %v263 = vld [vmem:[%s259 + $0x18] sm:$0xff]
        %v264 = vld [vmem:[%s259 + $0x20] sm:$0xff]
        %v265 = vld [vmem:[%s259 + $0x28] sm:$0xff]
        %v266 = vld [vmem:[%s259 + $0x30] sm:$0xff]
        %v267 = vld [vmem:[%s259 + $0x38] sm:$0xff]
        %v268 = vlaneseq
        %v269 = vshrl.u32 %v268, 7
        %v270 = vsub.s32 1, %v269
        %v271 = vrot.slane %v203, %v270
        %v272 = vlaneseq
        %v273 = vshrl.u32 %v272, 7
        %v274 = vsub.s32 5, %v273
        %v275 = vrot.slane %v203, %v274
        %v276 = vlaneseq
        %v277 = vshrl.u32 %v276, 7
        %v278 = vsub.s32 1, %v277
        %v279 = vrot.slane %v204, %v278
        %v280 = vlaneseq
        %v281 = vshrl.u32 %v280, 7
        %v282 = vsub.s32 5, %v281
        %v283 = vrot.slane %v204, %v282
        %v288 = vlaneseq
        %v289 = vshrl.u32 %v288, 7
        %v290 = vsub.s32 1, %v289
        %v291 = vrot.slane %v271, %v290
        %v292 = vlaneseq
        %v293 = vshrl.u32 %v292, 7
        %v294 = vsub.s32 1, %v293
        %v295 = vrot.slane %v275, %v294
        %v296 = vlaneseq
        %v297 = vshrl.u32 %v296, 7
        %v298 = vsub.s32 1, %v297
        %v299 = vrot.slane %v279, %v298
        %v300 = vlaneseq
        %v301 = vshrl.u32 %v300, 7
        %v302 = vsub.s32 1, %v301
        %v303 = vrot.slane %v283, %v302
        %v304 = vmul.f32 %v260, %v291
        %v305 = vmul.f32 %v261, %v295
        %v306 = vmul.f32 %v262, %v299
        %v307 = vmul.f32 %v263, %v303
        %v308 = vmul.f32 %v264, %v291
        %v309 = vmul.f32 %v265, %v295
        %v310 = vmul.f32 %v266, %v299
        %v311 = vmul.f32 %v267, %v303
        %v312 = vadd.f32 %v251, %v304
        %v313 = vadd.f32 %v252, %v305
        %v314 = vadd.f32 %v253, %v306
        %v315 = vadd.f32 %v254, %v307
        %v316 = vadd.f32 %v255, %v308
        %v317 = vadd.f32 %v256, %v309
        %v318 = vadd.f32 %v257, %v310
        %v319 = vadd.f32 %v258, %v311
        %s320 = scalar_lea.vmem %s165, 128 [#allocation2]
        %v321 = vld [vmem:[%s320] sm:$0xff]
        %v322 = vld [vmem:[%s320 + $0x8] sm:$0xff]
        %v323 = vld [vmem:[%s320 + $0x10] sm:$0xff]
        %v324 = vld [vmem:[%s320 + $0x18] sm:$0xff]
        %v325 = vld [vmem:[%s320 + $0x20] sm:$0xff]
        %v326 = vld [vmem:[%s320 + $0x28] sm:$0xff]
        %v327 = vld [vmem:[%s320 + $0x30] sm:$0xff]
        %v328 = vld [vmem:[%s320 + $0x38] sm:$0xff]
        %v329 = vlaneseq
        %v330 = vshrl.u32 %v329, 7
        %v331 = vsub.s32 2, %v330
        %v332 = vrot.slane %v203, %v331
        %v333 = vlaneseq
        %v334 = vshrl.u32 %v333, 7
        %v335 = vsub.s32 6, %v334
        %v336 = vrot.slane %v203, %v335
        %v337 = vlaneseq
        %v338 = vshrl.u32 %v337, 7
        %v339 = vsub.s32 2, %v338
        %v340 = vrot.slane %v204, %v339
        %v341 = vlaneseq
        %v342 = vshrl.u32 %v341, 7
        %v343 = vsub.s32 6, %v342
        %v344 = vrot.slane %v204, %v343
        %v349 = vlaneseq
        %v350 = vshrl.u32 %v349, 7
        %v351 = vsub.s32 2, %v350
        %v352 = vrot.slane %v332, %v351
        %v353 = vlaneseq
        %v354 = vshrl.u32 %v353, 7
        %v355 = vsub.s32 2, %v354
        %v356 = vrot.slane %v336, %v355
        %v357 = vlaneseq
        %v358 = vshrl.u32 %v357, 7
        %v359 = vsub.s32 2, %v358
        %v360 = vrot.slane %v340, %v359
        %v361 = vlaneseq
        %v362 = vshrl.u32 %v361, 7
        %v363 = vsub.s32 2, %v362
        %v364 = vrot.slane %v344, %v363
        %v365 = vmul.f32 %v321, %v352
        %v366 = vmul.f32 %v322, %v356
        %v367 = vmul.f32 %v323, %v360
        %v368 = vmul.f32 %v324, %v364
        %v369 = vmul.f32 %v325, %v352
        %v370 = vmul.f32 %v326, %v356
        %v371 = vmul.f32 %v327, %v360
        %v372 = vmul.f32 %v328, %v364
        %v373 = vadd.f32 %v312, %v365
        %v374 = vadd.f32 %v313, %v366
        %v375 = vadd.f32 %v314, %v367
        %v376 = vadd.f32 %v315, %v368
        %v377 = vadd.f32 %v316, %v369
        %v378 = vadd.f32 %v317, %v370
        %v379 = vadd.f32 %v318, %v371
        %v380 = vadd.f32 %v319, %v372
        %s381 = scalar_lea.vmem %s165, 192 [#allocation2]
        %v382 = vld [vmem:[%s381] sm:$0xff]
        %v383 = vld [vmem:[%s381 + $0x8] sm:$0xff]
        %v384 = vld [vmem:[%s381 + $0x10] sm:$0xff]
        %v385 = vld [vmem:[%s381 + $0x18] sm:$0xff]
        %v386 = vld [vmem:[%s381 + $0x20] sm:$0xff]
        %v387 = vld [vmem:[%s381 + $0x28] sm:$0xff]
        %v388 = vld [vmem:[%s381 + $0x30] sm:$0xff]
        %v389 = vld [vmem:[%s381 + $0x38] sm:$0xff]
        %v390 = vlaneseq
        %v391 = vshrl.u32 %v390, 7
        %v392 = vsub.s32 3, %v391
        %v393 = vrot.slane %v203, %v392
        %v394 = vlaneseq
        %v395 = vshrl.u32 %v394, 7
        %v396 = vsub.s32 7, %v395
        %v397 = vrot.slane %v203, %v396
        %v398 = vlaneseq
        %v399 = vshrl.u32 %v398, 7
        %v400 = vsub.s32 3, %v399
        %v401 = vrot.slane %v204, %v400
        %v402 = vlaneseq
        %v403 = vshrl.u32 %v402, 7
        %v404 = vsub.s32 7, %v403
        %v405 = vrot.slane %v204, %v404
        %v410 = vlaneseq
        %v411 = vshrl.u32 %v410, 7
        %v412 = vsub.s32 3, %v411
        %v413 = vrot.slane %v393, %v412
        %v414 = vlaneseq
        %v415 = vshrl.u32 %v414, 7
        %v416 = vsub.s32 3, %v415
        %v417 = vrot.slane %v397, %v416
        %v418 = vlaneseq
        %v419 = vshrl.u32 %v418, 7
        %v420 = vsub.s32 3, %v419
        %v421 = vrot.slane %v401, %v420
        %v422 = vlaneseq
        %v423 = vshrl.u32 %v422, 7
        %v424 = vsub.s32 3, %v423
        %v425 = vrot.slane %v405, %v424
        %v426 = vmul.f32 %v382, %v413
        %v427 = vmul.f32 %v383, %v417
        %v428 = vmul.f32 %v384, %v421
        %v429 = vmul.f32 %v385, %v425
        %v430 = vmul.f32 %v386, %v413
        %v431 = vmul.f32 %v387, %v417
        %v432 = vmul.f32 %v388, %v421
        %v433 = vmul.f32 %v389, %v425
        %v434 = vadd.f32 %v373, %v426
        %v435 = vadd.f32 %v374, %v427
        %v436 = vadd.f32 %v375, %v428
        %v437 = vadd.f32 %v376, %v429
        %v438 = vadd.f32 %v377, %v430
        %v439 = vadd.f32 %v378, %v431
        %v440 = vadd.f32 %v379, %v432
        %v441 = vadd.f32 %v380, %v433
        %442 = vst [vmem:[%s199] sm:$0xff] %v434
        %443 = vst [vmem:[%s199 + $0x8] sm:$0xff] %v435
        %444 = vst [vmem:[%s199 + $0x10] sm:$0xff] %v436
        %445 = vst [vmem:[%s199 + $0x18] sm:$0xff] %v437
        %446 = vst [vmem:[%s199 + $0x20] sm:$0xff] %v438
        %447 = vst [vmem:[%s199 + $0x28] sm:$0xff] %v439
        %448 = vst [vmem:[%s199 + $0x30] sm:$0xff] %v440
        %449 = vst [vmem:[%s199 + $0x38] sm:$0xff] %v441
        %s450 = sand.u32 %s82, 1
        %s451 = scalar_lea.sflag [#allocation4], %s450
        %s452 = sand.u32 %s82, 1
        %s453 = smul.addr %s452, 64
        %s454 = scalar_lea.vmem [#allocation7], %s453
        // Predicated region
        $region37: #{tpu_custom_call.1} parent=27 // pred_check
          %p455 = pneg %p92
        $region38: #{tpu_custom_call.1} parent=27 // pred_check_branch
          %457 = sbr.rel (%p455) target = $region40
        $region39: #{tpu_custom_call.1} parent=27 // pred_region
          %s458 = smul.u32 4, %s22
          %s460 = ssub.s32 1024, 1024
          %461 = vsyncadd %s451, %s460
          %s462 = smul.addr %s458, 128
          %s463 = scalar_lea.hbm %s2, %s462
          %s464 = sshll.u32 %s454, 4
          %s465 = int_to_ptr.vmem [resolvable:$true] %s464
          %470 = dma.vmem_to_hbm [thread:$0]  %s465, 1024, %s463, %s451, 512, 1024, 32
        $region40: #{tpu_custom_call.1} parent=27 // pred_fallthru
          _
      $region28: #{tpu_custom_call.1} parent=5 // pred_fallthru
        _
      %p471 = scmp.le.s32.totalorder 2, %s17
      // Predicated region
      $region41: #{tpu_custom_call.1} parent=5 // pred_check
        %p472 = pneg %p471
      $region42: #{tpu_custom_call.1} parent=5 // pred_check_branch
        %474 = sbr.rel (%p472) target = $region44
      $region43: #{tpu_custom_call.1} parent=5 // pred_region
        %s475 = ssub.s32 %s17, 2
        // Predicated region
        $region45: #{tpu_custom_call.1} parent=43 // pred_check
          %p476 = pneg %p98
        $region46: #{tpu_custom_call.1} parent=43 // pred_check_branch
          %478 = sbr.rel (%p476) target = $region48
        $region47: #{tpu_custom_call.1} parent=43 // pred_region
          %s479 = sand.u32 %s83, 1
          %s480 = scalar_lea.sflag [#allocation4], %s479
          %s481 = sand.u32 %s83, 1
          %s482 = smul.addr %s481, 64
          %s483 = scalar_lea.vmem [#allocation7], %s482
          %484 = dma.done %s480, 1024
        $region48: #{tpu_custom_call.1} parent=43 // pred_fallthru
          _
      $region44: #{tpu_custom_call.1} parent=5 // pred_fallthru
        _
    $region6: #{tpu_custom_call.1} parent=1 // loop_footer
      %s21 = sadd.s32 1, %s17
    $region7: #{tpu_custom_call.1} parent=1 // loop_footer_branch
      %16 = sbr.rel target = $region3
    $region8: #{tpu_custom_call.1} parent=1 // loop_exit
      _
    %485 = vsyncpa [#allocation3], 1
    %s486 = scalar_lea.sflag [#allocation3], 1
    %487 = vsyncpa %s486, 1
    %488 = vsyncpa [#allocation6], 1
    %s489 = scalar_lea.sflag [#allocation6], 1
    %490 = vsyncpa %s489, 1
    %491 = vsyncpa [#allocation4], 1
    %s492 = scalar_lea.sflag [#allocation4], 1
    %493 = vsyncpa %s492, 1

</llo_original>
